<compile_context>
chip_gen: v7x
topology: tpu7x:2x2x1
jax: 0.10.0
libtpu: 0.0.40
codegen_flags: <defaults>
</compile_context>

<pallas_src>
import jax
import jax.numpy as jnp
from jax import lax
from jax.experimental import pallas as pl
from jax.experimental.pallas import tpu as pltpu


# ----------------------------- Pallas kernel --------------------------------
def resnet_block_kernel(x_ref, halo_ref, s1_ref, t1_ref, w1_ref, b1_ref,
                        w2_ref, bf_ref, o_ref, stk1_ref, stk2_ref):
    j = pl.program_id(1)
    nj = pl.num_programs(1)
    Cin, TL = x_ref.shape[1], x_ref.shape[2]
    Cout = o_ref.shape[1]

    # ---- norm1 (BatchNorm1d eval, folded scale/shift) + SiLU, f32 on VPU ----
    x = x_ref[0]                                           # (Cin, TL) f32, raw
    ht = x * s1_ref[...] + t1_ref[...]
    ht = ht * jax.nn.sigmoid(ht)
    htb = ht.astype(jnp.bfloat16)

    # Halo columns (2 left | 2 right of this tile), same norm1+SiLU, zeroed at
    # the global sequence edges (conv1 zero-pads its *input*, i.e. SiLU(BN(x))).
    hal = halo_ref[0, 0] * s1_ref[...] + t1_ref[...]       # (Cin, 4)
    hal = hal * jax.nn.sigmoid(hal)
    hcol = lax.broadcasted_iota(jnp.int32, (Cin, 4), 1)
    keep = ((hcol < 2) & (j > 0)) | ((hcol >= 2) & (j < nj - 1))
    halb = jnp.where(keep, hal, 0.0).astype(jnp.bfloat16)

    # ---- conv1 (k=3, p=1) as ONE MXU matmul over stacked taps ----------------
    # stk1 column q corresponds to conv1 output at absolute position base-1+q;
    # row blocks hold the input at positions (pos-1, pos, pos+1).
    stk1_ref[0:Cin, 0:2] = halb[:, 0:2]
    stk1_ref[0:Cin, 2:TL + 2] = htb
    stk1_ref[Cin:2 * Cin, 0:1] = halb[:, 1:2]
    stk1_ref[Cin:2 * Cin, 1:TL + 1] = htb
    stk1_ref[Cin:2 * Cin, TL + 1:TL + 2] = halb[:, 2:3]
    stk1_ref[2 * Cin:3 * Cin, 0:TL] = htb
    stk1_ref[2 * Cin:3 * Cin, TL:TL + 2] = halb[:, 2:4]

    # conv1 weights carry the folded norm2 affine; bias = s2*b1 + t2.
    h1 = jnp.dot(w1_ref[...], stk1_ref[...],
                 preferred_element_type=jnp.float32) + b1_ref[...]   # (Cout, TL+2)
    # SiLU; dropout is identity in eval mode.
    h2 = (h1 * jax.nn.sigmoid(h1)).astype(jnp.bfloat16)

    # ---- conv2 (k=3, p=1) + nin_shortcut fused into ONE MXU matmul ----------
    stk2_ref[0:Cout, :] = h2[:, 0:TL]
    stk2_ref[Cout:2 * Cout, :] = h2[:, 1:TL + 1]
    stk2_ref[2 * Cout:3 * Cout, :] = h2[:, 2:TL + 2]
    stk2_ref[3 * Cout:3 * Cout + Cin, :] = x.astype(jnp.bfloat16)    # shortcut rows

    # conv2's zero padding applies to its *input* (post-SiLU), so the columns at
    # global positions -1 / L must be literal zeros, not conv1 evaluated there.
    @pl.when(j == 0)
    def _():
        stk2_ref[0:Cout, 0:1] = jnp.zeros((Cout, 1), jnp.bfloat16)

    @pl.when(j == nj - 1)
    def _():
        stk2_ref[2 * Cout:3 * Cout, TL - 1:TL] = jnp.zeros((Cout, 1), jnp.bfloat16)

    out = jnp.dot(w2_ref[...], stk2_ref[...],
                  preferred_element_type=jnp.float32) + bf_ref[...]  # bias = b2+bs
    o_ref[0] = out.astype(o_ref.dtype)


# ------------------------------- wrapper -------------------------------------
def _choose_l_tile(L, Cin, Cout, vmem_budget_bytes=20 * 1024 * 1024):
    """Largest lane tile that divides L, is a multiple of 128, and keeps the
    per-grid-step footprint (double-buffered I/O tiles + bf16 scratch) under a
    conservative VMEM budget.  Falls back to a single full-length tile."""
    def step_bytes(tl):
        io = 2 * 4 * tl * (Cin + Cout)                              # f32, x2 buf
        stk = 2 * (3 * Cin * (tl + 2) + (3 * Cout + Cin) * tl)      # bf16 scratch
        return io + stk
    best, tl = None, 128
    while tl <= min(L, 4096):
        if L % tl == 0 and step_bytes(tl) <= vmem_budget_bytes:
            best = tl
        tl += 128
    return best if best is not None else L


def resnet_block_forward(x, s1, t1, w1f, b1f, w2f, wsf, bfin, *, l_tile=None):
    """x: (N, Cin, L) f32.  s1/t1: (Cin,1) folded norm1.  w1f: (Cout, 3*Cin) bf16
    (taps stacked, norm2 folded in).  b1f: (Cout,1) = s2*b1 + t2.
    w2f: (Cout, 3*Cout) bf16.  wsf: (Cout, Cin) bf16.  bfin: (Cout,1) = b2 + bs."""
    N, Cin, L = x.shape
    Cout = w1f.shape[0]
    TL = l_tile if l_tile is not None else _choose_l_tile(L, Cin, Cout)
    assert L % TL == 0, (L, TL)
    nt = L // TL

    # Per-tile halo columns: [x[:, j*TL-2 : j*TL] | x[:, (j+1)*TL : (j+1)*TL+2]]
    # with zeros beyond the global sequence edges.  Shape (N, nt, Cin, 4).
    xp = jnp.pad(x, ((0, 0), (0, 0), (2, 2)))
    cols = (jnp.arange(nt) * TL)[:, None] + jnp.array([0, 1, TL + 2, TL + 3])[None, :]
    halo = jnp.take(xp, cols.reshape(-1), axis=2).reshape(N, Cin, nt, 4)
    halo = jnp.transpose(halo, (0, 2, 1, 3))

    # Fuse the 1x1 shortcut into the conv2 matmul.
    w2s = jnp.concatenate([w2f, wsf], axis=1)              # (Cout, 3*Cout + Cin)

    const = lambda shape: pl.BlockSpec(shape, lambda n, j: (0,) * len(shape))
    return pl.pallas_call(
        resnet_block_kernel,
        out_shape=jax.ShapeDtypeStruct((N, Cout, L), x.dtype),
        grid_spec=pltpu.PrefetchScalarGridSpec(
            num_scalar_prefetch=0,
            grid=(N, nt),
            in_specs=[
                pl.BlockSpec((1, Cin, TL), lambda n, j: (n, 0, j)),      # x tile
                pl.BlockSpec((1, 1, Cin, 4), lambda n, j: (n, j, 0, 0)),  # halo
                const((Cin, 1)),                 # s1
                const((Cin, 1)),                 # t1
                const((Cout, 3 * Cin)),          # w1 (bf16, norm2 folded)
                const((Cout, 1)),                # b1 folded
                const((Cout, 3 * Cout + Cin)),   # [w2 | ws] (bf16)
                const((Cout, 1)),                # final bias (b2 + bs)
            ],
            out_specs=pl.BlockSpec((1, Cout, TL), lambda n, j: (n, 0, j)),
            scratch_shapes=[
                pltpu.VMEM((3 * Cin, TL + 2), jnp.bfloat16),          # conv1 taps
                pltpu.VMEM((3 * Cout + Cin, TL), jnp.bfloat16),       # conv2 taps + x
            ],
        ),
        compiler_params=pltpu.CompilerParams(
            dimension_semantics=("parallel", "parallel"),
            vmem_limit_bytes=48 * 1024 * 1024,
        ),
    )(x, halo, s1, t1, w1f, b1f, w2s, bfin)


# --------------------- host-side parameter preparation -----------------------
def _fold_params(w1, b1, w2, b2, ws, bs,
                 g1, be1, rm1, rv1, g2, be2, rm2, rv2, eps=1e-5):
    # BatchNorm1d (eval, running stats) -> per-channel scale/shift.
    s1 = g1 / jnp.sqrt(rv1 + eps); t1 = be1 - rm1 * s1
    s2 = g2 / jnp.sqrt(rv2 + eps); t2 = be2 - rm2 * s2
    # Conv taps stacked along the contraction axis: [tap0 | tap1 | tap2].
    w1cat = jnp.concatenate([w1[:, :, 0], w1[:, :, 1], w1[:, :, 2]], axis=1)
    w2cat = jnp.concatenate([w2[:, :, 0], w2[:, :, 1], w2[:, :, 2]], axis=1)
    # Fold norm2 into conv1 (the affine sits between conv1 and the SiLU).
    w1f = (s2[:, None] * w1cat).astype(jnp.bfloat16)
    b1f = (s2 * b1 + t2)[:, None]
    w2f = w2cat.astype(jnp.bfloat16)
    wsf = ws.astype(jnp.bfloat16)
    bfin = (b2 + bs)[:, None]
    return s1[:, None], t1[:, None], w1f, b1f, w2f, wsf, bfin


# --------------------------- pure-JAX references -----------------------------
def _conv1d(x, w, b, padding):
    out = lax.conv_general_dilated(x, w, (1,), [(padding, padding)],
                                   dimension_numbers=('NCH', 'OIH', 'NCH'),
                                   precision=lax.Precision.HIGHEST)
    return out + b[None, :, None]


def _ref_forward_folded(x, s1, t1, w1f, b1f, w2f, wsf, bfin):
    """Mirrors the kernel's math (same bf16-rounded weights / conv inputs)."""
    f32 = jnp.float32
    Cout, threeCin = w1f.shape
    Cin = threeCin // 3
    h = x * s1[None] + t1[None]
    h = h * jax.nn.sigmoid(h)
    h = h.astype(jnp.bfloat16).astype(f32)
    w1_3 = w1f.astype(f32).reshape(Cout, 3, Cin).transpose(0, 2, 1)
    h = _conv1d(h, w1_3, b1f[:, 0], 1)
    h = h * jax.nn.sigmoid(h)
    h = h.astype(jnp.bfloat16).astype(f32)
    w2_3 = w2f.astype(f32).reshape(Cout, 3, Cout).transpose(0, 2, 1)
    h = _conv1d(h, w2_3, jnp.zeros((Cout,), f32), 1)
    xs = jnp.einsum('oc,ncl->nol', wsf.astype(f32),
                    x.astype(jnp.bfloat16).astype(f32),
                    precision=lax.Precision.HIGHEST)
    return h + xs + bfin[None]


def _bn_eval(x, g, b, rm, rv, eps):
    return ((x - rm[None, :, None]) / jnp.sqrt(rv + eps)[None, :, None]
            * g[None, :, None] + b[None, :, None])


def _ref_forward_module(x, w1, b1, w2, b2, ws, bs,
                        g1, be1, rm1, rv1, g2, be2, rm2, rv2, eps):
    """Literal PyTorch-module math (eval mode), all f32 — validates the folding."""
    h = _bn_eval(x, g1, be1, rm1, rv1, eps)
    h = h * jax.nn.sigmoid(h)
    h = _conv1d(h, w1, b1, 1)
    h = _bn_eval(h, g2, be2, rm2, rv2, eps)
    h = h * jax.nn.sigmoid(h)
    h = _conv1d(h, w2, b2, 1)          # dropout = identity in eval mode
    xs = _conv1d(x, ws[:, :, None], bs, 0)
    return xs + h


# ---------------------------------- test --------------------------------------
def _run_case(key, N, Cin, Cout, L, l_tile=None):
    ks = jax.random.split(key, 15)
    f32 = jnp.float32
    x = jax.random.normal(ks[0], (N, Cin, L), f32)
    w1 = 0.2 * jax.random.normal(ks[1], (Cout, Cin, 3), f32)
    b1 = 0.1 * jax.random.normal(ks[2], (Cout,), f32)
    w2 = 0.2 * jax.random.normal(ks[3], (Cout, Cout, 3), f32)
    b2 = 0.1 * jax.random.normal(ks[4], (Cout,), f32)
    ws = 0.2 * jax.random.normal(ks[5], (Cout, Cin), f32)
    bs = 0.1 * jax.random.normal(ks[6], (Cout,), f32)
    eps = 1e-5
    g1 = 1.0 + 0.1 * jax.random.normal(ks[7], (Cin,), f32)
    be1 = 0.1 * jax.random.normal(ks[8], (Cin,), f32)
    rm1 = 0.1 * jax.random.normal(ks[9], (Cin,), f32)
    rv1 = 1.0 + 0.1 * jnp.abs(jax.random.normal(ks[10], (Cin,), f32))
    g2 = 1.0 + 0.1 * jax.random.normal(ks[11], (Cout,), f32)
    be2 = 0.1 * jax.random.normal(ks[12], (Cout,), f32)
    rm2 = 0.1 * jax.random.normal(ks[13], (Cout,), f32)
    rv2 = 1.0 + 0.1 * jnp.abs(jax.random.normal(ks[14], (Cout,), f32))

    s1, t1, w1f, b1f, w2f, wsf, bfin = _fold_params(
        w1, b1, w2, b2, ws, bs, g1, be1, rm1, rv1, g2, be2, rm2, rv2, eps)

    out = resnet_block_forward(x, s1, t1, w1f, b1f, w2f, wsf, bfin, l_tile=l_tile)
    out = jax.block_until_ready(out)
    assert out.shape == (N, Cout, L)

    # Tight check against a reference that uses the same bf16-rounded operands.
    ref_q = _ref_forward_folded(x, s1, t1, w1f, b1f, w2f, wsf, bfin)
    err_q = float(jnp.max(jnp.abs(out - ref_q)))
    assert jnp.allclose(out, ref_q, atol=1e-2, rtol=1e-2), err_q

    # Loose check against the literal f32 module math (validates BN/bias folding).
    ref_f = _ref_forward_module(x, w1, b1, w2, b2, ws, bs,
                                g1, be1, rm1, rv1, g2, be2, rm2, rv2, eps)
    err_f = float(jnp.max(jnp.abs(out - ref_f)))
    assert jnp.allclose(out, ref_f, atol=8e-2, rtol=8e-2), err_f


if __name__ == "__main__":
    key = jax.random.PRNGKey(0)
    k1, k2 = jax.random.split(key)
    # Small shapes consistent with the module (single L tile).
    _run_case(k1, N=2, Cin=4, Cout=8, L=16)
    # Multi-tile path: 3 lane-dense tiles of 128 -> exercises the halo logic.
    _run_case(k2, N=2, Cin=8, Cout=16, L=384, l_tile=128)
    print("KERNEL_OK")
</pallas_src>

<mosaic_0001>
module attributes {stable_mosaic.version = 11 : i64} {
  func.func @resnet_block_kernel(%arg0: i32, %arg1: i32, %arg2: memref<1x4x16xf32, #tpu.memory_space<vmem>>, %arg3: memref<1x1x4x4xf32, #tpu.memory_space<vmem>>, %arg4: memref<4x1xf32, #tpu.memory_space<vmem>>, %arg5: memref<4x1xf32, #tpu.memory_space<vmem>>, %arg6: memref<8x12xbf16, #tpu.memory_space<vmem>>, %arg7: memref<8x1xf32, #tpu.memory_space<vmem>>, %arg8: memref<8x28xbf16, #tpu.memory_space<vmem>>, %arg9: memref<8x1xf32, #tpu.memory_space<vmem>>, %arg10: memref<1x8x16xf32, #tpu.memory_space<vmem>>, %arg11: memref<12x18xbf16, #tpu.memory_space<vmem>>, %arg12: memref<28x16xbf16, #tpu.memory_space<vmem>>) attributes {dimension_semantics = [#tpu.dimension_semantics<parallel>, #tpu.dimension_semantics<parallel>], iteration_bounds = array<i64: 2, 1>, scalar_prefetch = 0 : i64, scratch_operands = 2 : i64, tpu.core_type = #tpu.core_type<tc>, window_params = [{transform_indices = @transform_0, window_bounds = array<i64: 1, 4, 16>}, {transform_indices = @transform_1, window_bounds = array<i64: 1, 1, 4, 4>}, {pipeline_mode = #tpu.pipeline_mode<synchronous>, transform_indices = @transform_2, window_bounds = array<i64: 4, 1>}, {pipeline_mode = #tpu.pipeline_mode<synchronous>, transform_indices = @transform_3, window_bounds = array<i64: 4, 1>}, {pipeline_mode = #tpu.pipeline_mode<synchronous>, transform_indices = @transform_4, window_bounds = array<i64: 8, 12>}, {pipeline_mode = #tpu.pipeline_mode<synchronous>, transform_indices = @transform_5, window_bounds = array<i64: 8, 1>}, {pipeline_mode = #tpu.pipeline_mode<synchronous>, transform_indices = @transform_6, window_bounds = array<i64: 8, 28>}, {pipeline_mode = #tpu.pipeline_mode<synchronous>, transform_indices = @transform_7, window_bounds = array<i64: 8, 1>}, {transform_indices = @transform_8, window_bounds = array<i64: 1, 8, 16>}]} {
    %c0 = arith.constant 0 : index
    %c0_0 = arith.constant 0 : index
    %c0_1 = arith.constant 0 : index
    %0 = vector.load %arg2[%c0, %c0_0, %c0_1] : memref<1x4x16xf32, #tpu.memory_space<vmem>>, vector<1x4x16xf32>
    %1 = vector.shape_cast %0 : vector<1x4x16xf32> to vector<4x16xf32>
    %c0_2 = arith.constant 0 : index
    %c0_3 = arith.constant 0 : index
    %2 = vector.load %arg4[%c0_2, %c0_3] : memref<4x1xf32, #tpu.memory_space<vmem>>, vector<4x1xf32>
    %3 = vector.broadcast %2 : vector<4x1xf32> to vector<4x16xf32>
    %4 = arith.mulf %1, %3 : vector<4x16xf32>
    %c0_4 = arith.constant 0 : index
    %c0_5 = arith.constant 0 : index
    %5 = vector.load %arg5[%c0_4, %c0_5] : memref<4x1xf32, #tpu.memory_space<vmem>>, vector<4x1xf32>
    %6 = vector.broadcast %5 : vector<4x1xf32> to vector<4x16xf32>
    %7 = arith.addf %4, %6 : vector<4x16xf32>
    %8 = arith.negf %7 : vector<4x16xf32>
    %9 = math.exp %8 : vector<4x16xf32>
    %cst = arith.constant 1.000000e+00 : f32
    %10 = vector.broadcast %cst : f32 to vector<4x16xf32>
    %11 = arith.addf %10, %9 : vector<4x16xf32>
    %12 = arith.divf %10, %11 : vector<4x16xf32>
    %13 = arith.mulf %7, %12 : vector<4x16xf32>
    %14 = arith.truncf %13 : vector<4x16xf32> to vector<4x16xbf16>
    %c0_6 = arith.constant 0 : index
    %c0_7 = arith.constant 0 : index
    %c0_8 = arith.constant 0 : index
    %c0_9 = arith.constant 0 : index
    %15 = vector.load %arg3[%c0_6, %c0_7, %c0_8, %c0_9] : memref<1x1x4x4xf32, #tpu.memory_space<vmem>>, vector<1x1x4x4xf32>
    %16 = vector.shape_cast %15 : vector<1x1x4x4xf32> to vector<4x4xf32>
    %c0_10 = arith.constant 0 : index
    %c0_11 = arith.constant 0 : index
    %17 = vector.load %arg4[%c0_10, %c0_11] : memref<4x1xf32, #tpu.memory_space<vmem>>, vector<4x1xf32>
    %18 = vector.broadcast %17 : vector<4x1xf32> to vector<4x4xf32>
    %19 = arith.mulf %16, %18 : vector<4x4xf32>
    %c0_12 = arith.constant 0 : index
    %c0_13 = arith.constant 0 : index
    %20 = vector.load %arg5[%c0_12, %c0_13] : memref<4x1xf32, #tpu.memory_space<vmem>>, vector<4x1xf32>
    %21 = vector.broadcast %20 : vector<4x1xf32> to vector<4x4xf32>
    %22 = arith.addf %19, %21 : vector<4x4xf32>
    %23 = arith.negf %22 : vector<4x4xf32>
    %24 = math.exp %23 : vector<4x4xf32>
    %cst_14 = arith.constant 1.000000e+00 : f32
    %25 = vector.broadcast %cst_14 : f32 to vector<4x4xf32>
    %26 = arith.addf %25, %24 : vector<4x4xf32>
    %27 = arith.divf %25, %26 : vector<4x4xf32>
    %28 = arith.mulf %22, %27 : vector<4x4xf32>
    %29 = tpu.iota {dimensions = array<i32: 1>} : vector<4x4xi32>
    %c2_i32 = arith.constant 2 : i32
    %30 = vector.broadcast %c2_i32 : i32 to vector<4x4xi32>
    %31 = arith.cmpi slt, %29, %30 : vector<4x4xi32>
    %c0_i32 = arith.constant 0 : i32
    %32 = arith.cmpi sgt, %arg1, %c0_i32 : i32
    %33 = vector.broadcast %32 : i1 to vector<4x4xi1>
    %34 = arith.andi %31, %33 : vector<4x4xi1>
    %c2_i32_15 = arith.constant 2 : i32
    %35 = vector.broadcast %c2_i32_15 : i32 to vector<4x4xi32>
    %36 = arith.cmpi sge, %29, %35 : vector<4x4xi32>
    %c0_i32_16 = arith.constant 0 : i32
    %37 = arith.cmpi slt, %arg1, %c0_i32_16 : i32
    %38 = vector.broadcast %37 : i1 to vector<4x4xi1>
    %39 = arith.andi %36, %38 : vector<4x4xi1>
    %40 = arith.ori %34, %39 : vector<4x4xi1>
    %cst_17 = arith.constant 0.000000e+00 : f32
    %41 = vector.broadcast %cst_17 : f32 to vector<4x4xf32>
    %42 = arith.select %40, %28, %41 : vector<4x4xi1>, vector<4x4xf32>
    %43 = arith.truncf %42 : vector<4x4xf32> to vector<4x4xbf16>
    %44 = vector.extract_strided_slice %43 {offsets = [0, 0], sizes = [4, 2], strides = [1, 1]} : vector<4x4xbf16> to vector<4x2xbf16>
    %c0_18 = arith.constant 0 : index
    %c0_19 = arith.constant 0 : index
    %45 = vector.load %arg11[%c0_18, %c0_19] : memref<12x18xbf16, #tpu.memory_space<vmem>>, vector<4x2xbf16>
    tpu.vector_store %arg11[%c0_18, %c0_19], %44 {strides = array<i32>} : memref<12x18xbf16, #tpu.memory_space<vmem>>, vector<4x2xbf16>,
    %c0_20 = arith.constant 0 : index
    %c2 = arith.constant 2 : index
    %46 = vector.load %arg11[%c0_20, %c2] : memref<12x18xbf16, #tpu.memory_space<vmem>>, vector<4x16xbf16>
    tpu.vector_store %arg11[%c0_20, %c2], %14 {strides = array<i32>} : memref<12x18xbf16, #tpu.memory_space<vmem>>, vector<4x16xbf16>,
    %47 = vector.extract_strided_slice %43 {offsets = [0, 1], sizes = [4, 1], strides = [1, 1]} : vector<4x4xbf16> to vector<4x1xbf16>
    %c4 = arith.constant 4 : index
    %c0_21 = arith.constant 0 : index
    %48 = vector.load %arg11[%c4, %c0_21] : memref<12x18xbf16, #tpu.memory_space<vmem>>, vector<4x1xbf16>
    tpu.vector_store %arg11[%c4, %c0_21], %47 {strides = array<i32>} : memref<12x18xbf16, #tpu.memory_space<vmem>>, vector<4x1xbf16>,
    %c4_22 = arith.constant 4 : index
    %c1 = arith.constant 1 : index
    %49 = vector.load %arg11[%c4_22, %c1] : memref<12x18xbf16, #tpu.memory_space<vmem>>, vector<4x16xbf16>
    tpu.vector_store %arg11[%c4_22, %c1], %14 {strides = array<i32>} : memref<12x18xbf16, #tpu.memory_space<vmem>>, vector<4x16xbf16>,
    %50 = vector.extract_strided_slice %43 {offsets = [0, 2], sizes = [4, 1], strides = [1, 1]} : vector<4x4xbf16> to vector<4x1xbf16>
    %c4_23 = arith.constant 4 : index
    %c17 = arith.constant 17 : index
    %51 = vector.load %arg11[%c4_23, %c17] : memref<12x18xbf16, #tpu.memory_space<vmem>>, vector<4x1xbf16>
    tpu.vector_store %arg11[%c4_23, %c17], %50 {strides = array<i32>} : memref<12x18xbf16, #tpu.memory_space<vmem>>, vector<4x1xbf16>,
    %c8 = arith.constant 8 : index
    %c0_24 = arith.constant 0 : index
    %52 = vector.load %arg11[%c8, %c0_24] : memref<12x18xbf16, #tpu.memory_space<vmem>>, vector<4x16xbf16>
    tpu.vector_store %arg11[%c8, %c0_24], %14 {strides = array<i32>} : memref<12x18xbf16, #tpu.memory_space<vmem>>, vector<4x16xbf16>,
    %53 = vector.extract_strided_slice %43 {offsets = [0, 2], sizes = [4, 2], strides = [1, 1]} : vector<4x4xbf16> to vector<4x2xbf16>
    %c8_25 = arith.constant 8 : index
    %c16 = arith.constant 16 : index
    %54 = vector.load %arg11[%c8_25, %c16] : memref<12x18xbf16, #tpu.memory_space<vmem>>, vector<4x2xbf16>
    tpu.vector_store %arg11[%c8_25, %c16], %53 {strides = array<i32>} : memref<12x18xbf16, #tpu.memory_space<vmem>>, vector<4x2xbf16>,
    %c0_26 = arith.constant 0 : index
    %c0_27 = arith.constant 0 : index
    %55 = vector.load %arg6[%c0_26, %c0_27] : memref<8x12xbf16, #tpu.memory_space<vmem>>, vector<8x12xbf16>
    %c0_28 = arith.constant 0 : index
    %c0_29 = arith.constant 0 : index
    %56 = vector.load %arg11[%c0_28, %c0_29] : memref<12x18xbf16, #tpu.memory_space<vmem>>, vector<12x18xbf16>
    %cst_30 = arith.constant dense<0.000000e+00> : vector<8x18xf32>
    %57 = tpu.matmul %55, %56, %cst_30 {dimension_numbers = #tpu.dot_dimension_numbers<[1], [0], [0], [1], [0, 0, 1, 1], [], []>} : vector<8x12xbf16>, vector<12x18xbf16>, vector<8x18xf32> -> vector<8x18xf32>
    %c0_31 = arith.constant 0 : index
    %c0_32 = arith.constant 0 : index
    %58 = vector.load %arg7[%c0_31, %c0_32] : memref<8x1xf32, #tpu.memory_space<vmem>>, vector<8x1xf32>
    %59 = vector.broadcast %58 : vector<8x1xf32> to vector<8x18xf32>
    %60 = arith.addf %57, %59 : vector<8x18xf32>
    %61 = arith.negf %60 : vector<8x18xf32>
    %62 = math.exp %61 : vector<8x18xf32>
    %cst_33 = arith.constant 1.000000e+00 : f32
    %63 = vector.broadcast %cst_33 : f32 to vector<8x18xf32>
    %64 = arith.addf %63, %62 : vector<8x18xf32>
    %65 = arith.divf %63, %64 : vector<8x18xf32>
    %66 = arith.mulf %60, %65 : vector<8x18xf32>
    %67 = arith.truncf %66 : vector<8x18xf32> to vector<8x18xbf16>
    %68 = vector.extract_strided_slice %67 {offsets = [0, 0], sizes = [8, 16], strides = [1, 1]} : vector<8x18xbf16> to vector<8x16xbf16>
    %c0_34 = arith.constant 0 : index
    %c0_35 = arith.constant 0 : index
    %69 = vector.load %arg12[%c0_34, %c0_35] : memref<28x16xbf16, #tpu.memory_space<vmem>>, vector<8x16xbf16>
    tpu.vector_store %arg12[%c0_34, %c0_35], %68 {strides = array<i32>} : memref<28x16xbf16, #tpu.memory_space<vmem>>, vector<8x16xbf16>,
    %70 = vector.extract_strided_slice %67 {offsets = [0, 1], sizes = [8, 16], strides = [1, 1]} : vector<8x18xbf16> to vector<8x16xbf16>
    %c8_36 = arith.constant 8 : index
    %c0_37 = arith.constant 0 : index
    %71 = vector.load %arg12[%c8_36, %c0_37] : memref<28x16xbf16, #tpu.memory_space<vmem>>, vector<8x16xbf16>
    tpu.vector_store %arg12[%c8_36, %c0_37], %70 {strides = array<i32>} : memref<28x16xbf16, #tpu.memory_space<vmem>>, vector<8x16xbf16>,
    %72 = vector.extract_strided_slice %67 {offsets = [0, 2], sizes = [8, 16], strides = [1, 1]} : vector<8x18xbf16> to vector<8x16xbf16>
    %c16_38 = arith.constant 16 : index
    %c0_39 = arith.constant 0 : index
    %73 = vector.load %arg12[%c16_38, %c0_39] : memref<28x16xbf16, #tpu.memory_space<vmem>>, vector<8x16xbf16>
    tpu.vector_store %arg12[%c16_38, %c0_39], %72 {strides = array<i32>} : memref<28x16xbf16, #tpu.memory_space<vmem>>, vector<8x16xbf16>,
    %74 = arith.truncf %1 : vector<4x16xf32> to vector<4x16xbf16>
    %c24 = arith.constant 24 : index
    %c0_40 = arith.constant 0 : index
    %75 = vector.load %arg12[%c24, %c0_40] : memref<28x16xbf16, #tpu.memory_space<vmem>>, vector<4x16xbf16>
    tpu.vector_store %arg12[%c24, %c0_40], %74 {strides = array<i32>} : memref<28x16xbf16, #tpu.memory_space<vmem>>, vector<4x16xbf16>,
    %c0_i32_41 = arith.constant 0 : i32
    %76 = arith.cmpi eq, %arg1, %c0_i32_41 : i32
    %77 = arith.extui %76 : i1 to i32
    %c0_i32_42 = arith.constant 0 : i32
    %78 = arith.cmpi ne, %77, %c0_i32_42 : i32
    scf.if %78 {
      %cst_55 = arith.constant 0.000000e+00 : bf16
      %91 = vector.broadcast %cst_55 : bf16 to vector<8x1xbf16>
      %c0_56 = arith.constant 0 : index
      %c0_57 = arith.constant 0 : index
      %92 = vector.load %arg12[%c0_56, %c0_57] : memref<28x16xbf16, #tpu.memory_space<vmem>>, vector<8x1xbf16>
      tpu.vector_store %arg12[%c0_56, %c0_57], %91 {strides = array<i32>} : memref<28x16xbf16, #tpu.memory_space<vmem>>, vector<8x1xbf16>,
    } else {
    }
    %c0_i32_43 = arith.constant 0 : i32
    %79 = arith.cmpi eq, %arg1, %c0_i32_43 : i32
    %80 = arith.extui %79 : i1 to i32
    %c0_i32_44 = arith.constant 0 : i32
    %81 = arith.cmpi ne, %80, %c0_i32_44 : i32
    scf.if %81 {
      %cst_55 = arith.constant 0.000000e+00 : bf16
      %91 = vector.broadcast %cst_55 : bf16 to vector<8x1xbf16>
      %c16_56 = arith.constant 16 : index
      %c15 = arith.constant 15 : index
      %92 = vector.load %arg12[%c16_56, %c15] : memref<28x16xbf16, #tpu.memory_space<vmem>>, vector<8x1xbf16>
      tpu.vector_store %arg12[%c16_56, %c15], %91 {strides = array<i32>} : memref<28x16xbf16, #tpu.memory_space<vmem>>, vector<8x1xbf16>,
    } else {
    }
    %c0_45 = arith.constant 0 : index
    %c0_46 = arith.constant 0 : index
    %82 = vector.load %arg8[%c0_45, %c0_46] : memref<8x28xbf16, #tpu.memory_space<vmem>>, vector<8x28xbf16>
    %c0_47 = arith.constant 0 : index
    %c0_48 = arith.constant 0 : index
    %83 = vector.load %arg12[%c0_47, %c0_48] : memref<28x16xbf16, #tpu.memory_space<vmem>>, vector<28x16xbf16>
    %cst_49 = arith.constant dense<0.000000e+00> : vector<8x16xf32>
    %84 = tpu.matmul %82, %83, %cst_49 {dimension_numbers = #tpu.dot_dimension_numbers<[1], [0], [0], [1], [0, 0, 1, 1], [], []>} : vector<8x28xbf16>, vector<28x16xbf16>, vector<8x16xf32> -> vector<8x16xf32>
    %c0_50 = arith.constant 0 : index
    %c0_51 = arith.constant 0 : index
    %85 = vector.load %arg9[%c0_50, %c0_51] : memref<8x1xf32, #tpu.memory_space<vmem>>, vector<8x1xf32>
    %86 = vector.broadcast %85 : vector<8x1xf32> to vector<8x16xf32>
    %87 = arith.addf %84, %86 : vector<8x16xf32>
    %c0_52 = arith.constant 0 : index
    %c0_53 = arith.constant 0 : index
    %c0_54 = arith.constant 0 : index
    %88 = vector.load %arg10[%c0_52, %c0_53, %c0_54] : memref<1x8x16xf32, #tpu.memory_space<vmem>>, vector<1x8x16xf32>
    %89 = vector.shape_cast %88 : vector<1x8x16xf32> to vector<8x16xf32>
    %90 = vector.shape_cast %87 : vector<8x16xf32> to vector<1x8x16xf32>
    tpu.vector_store %arg10[%c0_52, %c0_53, %c0_54], %90 {strides = array<i32>} : memref<1x8x16xf32, #tpu.memory_space<vmem>>, vector<1x8x16xf32>,
    return
  }
  func.func @transform_0(%arg0: i32, %arg1: i32) -> (i32, i32, i32) {
    %c0_i32 = arith.constant 0 : i32
    %c0_i32_0 = arith.constant 0 : i32
    return %arg0, %c0_i32, %arg1 : i32, i32, i32
  }
  func.func @transform_1(%arg0: i32, %arg1: i32) -> (i32, i32, i32, i32) {
    %c0_i32 = arith.constant 0 : i32
    %c0_i32_0 = arith.constant 0 : i32
    %c0_i32_1 = arith.constant 0 : i32
    return %arg0, %arg1, %c0_i32, %c0_i32_0 : i32, i32, i32, i32
  }
  func.func @transform_2(%arg0: i32, %arg1: i32) -> (i32, i32) {
    %c0_i32 = arith.constant 0 : i32
    %c0_i32_0 = arith.constant 0 : i32
    %c0_i32_1 = arith.constant 0 : i32
    return %c0_i32, %c0_i32_0 : i32, i32
  }
  func.func @transform_3(%arg0: i32, %arg1: i32) -> (i32, i32) {
    %c0_i32 = arith.constant 0 : i32
    %c0_i32_0 = arith.constant 0 : i32
    %c0_i32_1 = arith.constant 0 : i32
    return %c0_i32, %c0_i32_0 : i32, i32
  }
  func.func @transform_4(%arg0: i32, %arg1: i32) -> (i32, i32) {
    %c0_i32 = arith.constant 0 : i32
    %c0_i32_0 = arith.constant 0 : i32
    %c0_i32_1 = arith.constant 0 : i32
    return %c0_i32, %c0_i32_0 : i32, i32
  }
  func.func @transform_5(%arg0: i32, %arg1: i32) -> (i32, i32) {
    %c0_i32 = arith.constant 0 : i32
    %c0_i32_0 = arith.constant 0 : i32
    %c0_i32_1 = arith.constant 0 : i32
    return %c0_i32, %c0_i32_0 : i32, i32
  }
  func.func @transform_6(%arg0: i32, %arg1: i32) -> (i32, i32) {
    %c0_i32 = arith.constant 0 : i32
    %c0_i32_0 = arith.constant 0 : i32
    %c0_i32_1 = arith.constant 0 : i32
    return %c0_i32, %c0_i32_0 : i32, i32
  }
  func.func @transform_7(%arg0: i32, %arg1: i32) -> (i32, i32) {
    %c0_i32 = arith.constant 0 : i32
    %c0_i32_0 = arith.constant 0 : i32
    %c0_i32_1 = arith.constant 0 : i32
    return %c0_i32, %c0_i32_0 : i32, i32
  }
  func.func @transform_8(%arg0: i32, %arg1: i32) -> (i32, i32, i32) {
    %c0_i32 = arith.constant 0 : i32
    %c0_i32_0 = arith.constant 0 : i32
    return %arg0, %c0_i32, %arg1 : i32, i32, i32
  }
}

</mosaic_0001>

<llo_original>
// kernel: tpu_custom_call.1
$region0: #{tpu_custom_call.1}
  #allocation0 [shape = 'u32[]', space=smem, size = 0x4, offset = 0x4, fixed_abs, tag = 'smem constant byte address 0x4 - core index']
  #allocation1 [shape = 'u32[144,128]{1,0:T(1,128)}', space=vmem, size = 0x12000, scoped, tag = 'internal scratch']
  #allocation2 [shape = 'bf16[12,18]{1,0:T(8,128)(2,1)}', space=vmem, size = 0x1000, scoped, tag = 'scratch operand']
  #allocation3 [shape = 'bf16[28,16]{1,0:T(8,128)(2,1)}', space=vmem, size = 0x2000, scoped, tag = 'scratch operand']
  %s0 = inlined_call_operand.vmem [shape: f32[2,4,16], index: 0, kind: input, shape index: {}]
  %s1 = inlined_call_operand.vmem [shape: f32[2,1,4,4], index: 1, kind: input, shape index: {}]
  %s2 = inlined_call_operand.vmem [shape: f32[4,1], index: 2, kind: input, shape index: {}]
  %s3 = inlined_call_operand.vmem [shape: f32[4,1], index: 3, kind: input, shape index: {}]
  %s4 = inlined_call_operand.vmem [shape: bf16[8,12], index: 4, kind: input, shape index: {}]
  %s5 = inlined_call_operand.vmem [shape: f32[8,1], index: 5, kind: input, shape index: {}]
  %s6 = inlined_call_operand.vmem [shape: bf16[8,28], index: 6, kind: input, shape index: {}]
  %s7 = inlined_call_operand.vmem [shape: f32[8,1], index: 7, kind: input, shape index: {}]
  %s8 = inlined_call_operand.hbm [shape: f32[2,8,16], index: 8, kind: output, shape index: {}]
  %s9 = sld [smem:[#allocation0]]
  $region69: #{tpu_custom_call.1} parent=0
    _
  %s11 = ssub.s32 1, %s9
  %s12 = scalar_select 0, %s11, %s9
  $region1: #{tpu_custom_call.1} parent=0
    #allocation4 [shape = 'u8[8192]{0}', space=vmem, size = 0x2000, scoped, tag = 'output window, operand 0']
    #allocation5 [shape = 's32[2]{0}', space=sflag, size = 0x8, scoped, tag = 'scoped memory for tpu_custom_call.1']
    %13 = vsyncpa [#allocation5], 0
    %s14 = scalar_lea.sflag [#allocation5], 1
    %15 = vsyncpa %s14, 0
    loop: start=0, step=1, limit=4
    $region2: #{tpu_custom_call.1} parent=1 // loop_pre_header
      _
    $region3: #{tpu_custom_call.1} parent=1 // loop_header
      %s17 = sphi 0, %s21
      %p18 = scmp.ge.s32.totalorder %s17, 4
      %s24 = sphi 0, %s36
      %s25 = sphi 0, %s32
      %s26 = sphi 0, %s24
      %s27 = sphi 0, %s25
      %s28 = sphi 0, %s26
      %s29 = sphi 0, %s27
      %s41 = sphi 0, %s43
      %s44 = sphi 0, %s41
      %s45 = sphi 0, %s44
      %s61 = sphi 0, %s45
      %s69 = sphi 0, %s71
      %s72 = sphi 0, %s69
      %s73 = sphi 0, %s72
      %s89 = sphi 0, %s73
      %s93 = sphi 0, %s93
      %s95 = sphi 0, %s93
      %s96 = sphi 0, %s95
      %s110 = sphi 0, %s96
      %s114 = sphi 0, %s114
      %s116 = sphi 0, %s114
      %s117 = sphi 0, %s116
      %s131 = sphi 0, %s117
      %s135 = sphi 0, %s135
      %s137 = sphi 0, %s135
      %s138 = sphi 0, %s137
      %s152 = sphi 0, %s138
      %s156 = sphi 0, %s156
      %s158 = sphi 0, %s156
      %s159 = sphi 0, %s158
      %s173 = sphi 0, %s159
      %s177 = sphi 0, %s177
      %s179 = sphi 0, %s177
      %s180 = sphi 0, %s179
      %s194 = sphi 0, %s180
      %s198 = sphi 0, %s198
      %s200 = sphi 0, %s198
      %s201 = sphi 0, %s200
      %s215 = sphi 0, %s201
      %s223 = sphi 0, %s225
      %s226 = sphi 0, %s223
      %s227 = sphi 0, %s226
      %s243 = sphi 0, %s227
    $region4: #{tpu_custom_call.1} parent=1 // loop_header_branch
      %20 = sbr.rel (%p18) target = $region8
    $region5: #{tpu_custom_call.1} parent=1 // loop_body
      %s22 = ssub.s32 %s17, 1
      %s23 = ssub.s32 %s17, 2
      %s30 = sadd.s32 1, %s25
      %p31 = scmp.ge.s32.totalorder %s30, 1
      %s32 = scalar_select %p31, 0, %s30
      %s33 = sadd.s32 1, %s24
      %s34 = scalar_select %p31, %s33, %s24
      %p35 = scmp.ge.s32.totalorder %s34, 2
      %s36 = scalar_select %p35, 0, %s34
      %s37 = ssub.s32 %s24, %s36
      %s38 = ssub.s32 %s25, %s32
      %s39 = sor.u32 %s37, %s38
      %p40 = scmp.eq.s32.totalorder %s39, 0
      %s42 = sadd.s32 %s41, 1
      %s43 = scalar_select %p40, %s41, %s42
      %p46 = pneg %p40
      %p47 = scmp.eq.s32.totalorder %s17, 1
      %p48 = por %p46, %p47
      %p49 = scmp.ne.s32.totalorder %s41, %s44
      %p50 = scmp.eq.s32.totalorder %s17, 0
      %p51 = por %p49, %p50
      %p52 = scmp.ne.s32.totalorder %s41, %s44
      %p53 = scmp.eq.s32.totalorder %s22, 1
      %p54 = por %p52, %p53
      %p55 = scmp.ne.s32.totalorder %s44, %s45
      %p56 = scmp.eq.s32.totalorder %s22, 0
      %p57 = por %p55, %p56
      %p58 = scmp.ne.s32.totalorder %s44, %s45
      %p59 = scmp.eq.s32.totalorder %s23, 1
      %p60 = por %p58, %p59
      %p62 = scmp.ne.s32.totalorder %s45, %s61
      %p63 = scmp.eq.s32.totalorder %s23, 0
      %p64 = por %p62, %p63
      %s65 = ssub.s32 %s24, %s36
      %s66 = ssub.s32 %s25, %s32
      %s67 = sor.u32 %s65, %s66
      %p68 = scmp.eq.s32.totalorder %s67, 0
      %s70 = sadd.s32 %s69, 1
      %s71 = scalar_select %p68, %s69, %s70
      %p74 = pneg %p68
      %p75 = scmp.eq.s32.totalorder %s17, 1
      %p76 = por %p74, %p75
      %p77 = scmp.ne.s32.totalorder %s69, %s72
      %p78 = scmp.eq.s32.totalorder %s17, 0
      %p79 = por %p77, %p78
      %p80 = scmp.ne.s32.totalorder %s69, %s72
      %p81 = scmp.eq.s32.totalorder %s22, 1
      %p82 = por %p80, %p81
      %p83 = scmp.ne.s32.totalorder %s72, %s73
      %p84 = scmp.eq.s32.totalorder %s22, 0
      %p85 = por %p83, %p84
      %p86 = scmp.ne.s32.totalorder %s72, %s73
      %p87 = scmp.eq.s32.totalorder %s23, 1
      %p88 = por %p86, %p87
      %p90 = scmp.ne.s32.totalorder %s73, %s89
      %p91 = scmp.eq.s32.totalorder %s23, 0
      %p92 = por %p90, %p91
      %s94 = sadd.s32 %s93, 1
      %p97 = scmp.eq.s32.totalorder %s17, 1
      %p98 = scmp.ne.s32.totalorder %s93, %s95
      %p99 = scmp.eq.s32.totalorder %s17, 0
      %p100 = por %p98, %p99
      %p101 = scmp.ne.s32.totalorder %s93, %s95
      %p102 = scmp.eq.s32.totalorder %s22, 1
      %p103 = por %p101, %p102
      %p104 = scmp.ne.s32.totalorder %s95, %s96
      %p105 = scmp.eq.s32.totalorder %s22, 0
      %p106 = por %p104, %p105
      %p107 = scmp.ne.s32.totalorder %s95, %s96
      %p108 = scmp.eq.s32.totalorder %s23, 1
      %p109 = por %p107, %p108
      %p111 = scmp.ne.s32.totalorder %s96, %s110
      %p112 = scmp.eq.s32.totalorder %s23, 0
      %p113 = por %p111, %p112
      %s115 = sadd.s32 %s114, 1
      %p118 = scmp.eq.s32.totalorder %s17, 1
      %p119 = scmp.ne.s32.totalorder %s114, %s116
      %p120 = scmp.eq.s32.totalorder %s17, 0
      %p121 = por %p119, %p120
      %p122 = scmp.ne.s32.totalorder %s114, %s116
      %p123 = scmp.eq.s32.totalorder %s22, 1
      %p124 = por %p122, %p123
      %p125 = scmp.ne.s32.totalorder %s116, %s117
      %p126 = scmp.eq.s32.totalorder %s22, 0
      %p127 = por %p125, %p126
      %p128 = scmp.ne.s32.totalorder %s116, %s117
      %p129 = scmp.eq.s32.totalorder %s23, 1
      %p130 = por %p128, %p129
      %p132 = scmp.ne.s32.totalorder %s117, %s131
      %p133 = scmp.eq.s32.totalorder %s23, 0
      %p134 = por %p132, %p133
      %s136 = sadd.s32 %s135, 1
      %p139 = scmp.eq.s32.totalorder %s17, 1
      %p140 = scmp.ne.s32.totalorder %s135, %s137
      %p141 = scmp.eq.s32.totalorder %s17, 0
      %p142 = por %p140, %p141
      %p143 = scmp.ne.s32.totalorder %s135, %s137
      %p144 = scmp.eq.s32.totalorder %s22, 1
      %p145 = por %p143, %p144
      %p146 = scmp.ne.s32.totalorder %s137, %s138
      %p147 = scmp.eq.s32.totalorder %s22, 0
      %p148 = por %p146, %p147
      %p149 = scmp.ne.s32.totalorder %s137, %s138
      %p150 = scmp.eq.s32.totalorder %s23, 1
      %p151 = por %p149, %p150
      %p153 = scmp.ne.s32.totalorder %s138, %s152
      %p154 = scmp.eq.s32.totalorder %s23, 0
      %p155 = por %p153, %p154
      %s157 = sadd.s32 %s156, 1
      %p160 = scmp.eq.s32.totalorder %s17, 1
      %p161 = scmp.ne.s32.totalorder %s156, %s158
      %p162 = scmp.eq.s32.totalorder %s17, 0
      %p163 = por %p161, %p162
      %p164 = scmp.ne.s32.totalorder %s156, %s158
      %p165 = scmp.eq.s32.totalorder %s22, 1
      %p166 = por %p164, %p165
      %p167 = scmp.ne.s32.totalorder %s158, %s159
      %p168 = scmp.eq.s32.totalorder %s22, 0
      %p169 = por %p167, %p168
      %p170 = scmp.ne.s32.totalorder %s158, %s159
      %p171 = scmp.eq.s32.totalorder %s23, 1
      %p172 = por %p170, %p171
      %p174 = scmp.ne.s32.totalorder %s159, %s173
      %p175 = scmp.eq.s32.totalorder %s23, 0
      %p176 = por %p174, %p175
      %s178 = sadd.s32 %s177, 1
      %p181 = scmp.eq.s32.totalorder %s17, 1
      %p182 = scmp.ne.s32.totalorder %s177, %s179
      %p183 = scmp.eq.s32.totalorder %s17, 0
      %p184 = por %p182, %p183
      %p185 = scmp.ne.s32.totalorder %s177, %s179
      %p186 = scmp.eq.s32.totalorder %s22, 1
      %p187 = por %p185, %p186
      %p188 = scmp.ne.s32.totalorder %s179, %s180
      %p189 = scmp.eq.s32.totalorder %s22, 0
      %p190 = por %p188, %p189
      %p191 = scmp.ne.s32.totalorder %s179, %s180
      %p192 = scmp.eq.s32.totalorder %s23, 1
      %p193 = por %p191, %p192
      %p195 = scmp.ne.s32.totalorder %s180, %s194
      %p196 = scmp.eq.s32.totalorder %s23, 0
      %p197 = por %p195, %p196
      %s199 = sadd.s32 %s198, 1
      %p202 = scmp.eq.s32.totalorder %s17, 1
      %p203 = scmp.ne.s32.totalorder %s198, %s200
      %p204 = scmp.eq.s32.totalorder %s17, 0
      %p205 = por %p203, %p204
      %p206 = scmp.ne.s32.totalorder %s198, %s200
      %p207 = scmp.eq.s32.totalorder %s22, 1
      %p208 = por %p206, %p207
      %p209 = scmp.ne.s32.totalorder %s200, %s201
      %p210 = scmp.eq.s32.totalorder %s22, 0
      %p211 = por %p209, %p210
      %p212 = scmp.ne.s32.totalorder %s200, %s201
      %p213 = scmp.eq.s32.totalorder %s23, 1
      %p214 = por %p212, %p213
      %p216 = scmp.ne.s32.totalorder %s201, %s215
      %p217 = scmp.eq.s32.totalorder %s23, 0
      %p218 = por %p216, %p217
      %s219 = ssub.s32 %s24, %s36
      %s220 = ssub.s32 %s25, %s32
      %s221 = sor.u32 %s219, %s220
      %p222 = scmp.eq.s32.totalorder %s221, 0
      %s224 = sadd.s32 %s223, 1
      %s225 = scalar_select %p222, %s223, %s224
      %p228 = pneg %p222
      %p229 = scmp.eq.s32.totalorder %s17, 1
      %p230 = por %p228, %p229
      %p231 = scmp.ne.s32.totalorder %s223, %s226
      %p232 = scmp.eq.s32.totalorder %s17, 0
      %p233 = por %p231, %p232
      %p234 = scmp.ne.s32.totalorder %s223, %s226
      %p235 = scmp.eq.s32.totalorder %s22, 1
      %p236 = por %p234, %p235
      %p237 = scmp.ne.s32.totalorder %s226, %s227
      %p238 = scmp.eq.s32.totalorder %s22, 0
      %p239 = por %p237, %p238
      %p240 = scmp.ne.s32.totalorder %s226, %s227
      %p241 = scmp.eq.s32.totalorder %s23, 1
      %p242 = por %p240, %p241
      %p244 = scmp.ne.s32.totalorder %s227, %s243
      %p245 = scmp.eq.s32.totalorder %s23, 0
      %p246 = por %p244, %p245
      %p247 = scmp.le.s32.totalorder 1, %s17
      %p248 = scmp.lt.s32.totalorder %s17, 3
      %p249 = pnand %p247, %p248
      %p250 = pneg %p249
      // Predicated region
      $region9: #{tpu_custom_call.1} parent=5 // pred_check
        _
      $region10: #{tpu_custom_call.1} parent=5 // pred_check_branch
        %252 = sbr.rel (%p249) target = $region12
      $region11: #{tpu_custom_call.1} parent=5 // pred_region
        %s253 = ssub.s32 %s17, 1
        // Predicated region
        $region13: #{tpu_custom_call.1} parent=11 // pred_check
          %p254 = pneg %p106
        $region14: #{tpu_custom_call.1} parent=11 // pred_check_branch
          %256 = sbr.rel (%p254) target = $region16
        $region15: #{tpu_custom_call.1} parent=11 // pred_region
          _
        $region16: #{tpu_custom_call.1} parent=11 // pred_fallthru
          _
        // Predicated region
        $region17: #{tpu_custom_call.1} parent=11 // pred_check
          %p257 = pneg %p127
        $region18: #{tpu_custom_call.1} parent=11 // pred_check_branch
          %259 = sbr.rel (%p257) target = $region20
        $region19: #{tpu_custom_call.1} parent=11 // pred_region
          _
        $region20: #{tpu_custom_call.1} parent=11 // pred_fallthru
          _
        // Predicated region
        $region21: #{tpu_custom_call.1} parent=11 // pred_check
          %p260 = pneg %p148
        $region22: #{tpu_custom_call.1} parent=11 // pred_check_branch
          %262 = sbr.rel (%p260) target = $region24
        $region23: #{tpu_custom_call.1} parent=11 // pred_region
          _
        $region24: #{tpu_custom_call.1} parent=11 // pred_fallthru
          _
        // Predicated region
        $region25: #{tpu_custom_call.1} parent=11 // pred_check
          %p263 = pneg %p169
        $region26: #{tpu_custom_call.1} parent=11 // pred_check_branch
          %265 = sbr.rel (%p263) target = $region28
        $region27: #{tpu_custom_call.1} parent=11 // pred_region
          _
        $region28: #{tpu_custom_call.1} parent=11 // pred_fallthru
          _
        // Predicated region
        $region29: #{tpu_custom_call.1} parent=11 // pred_check
          %p266 = pneg %p190
        $region30: #{tpu_custom_call.1} parent=11 // pred_check_branch
          %268 = sbr.rel (%p266) target = $region32
        $region31: #{tpu_custom_call.1} parent=11 // pred_region
          _
        $region32: #{tpu_custom_call.1} parent=11 // pred_fallthru
          _
        // Predicated region
        $region33: #{tpu_custom_call.1} parent=11 // pred_check
          %p269 = pneg %p211
        $region34: #{tpu_custom_call.1} parent=11 // pred_check_branch
          %271 = sbr.rel (%p269) target = $region36
        $region35: #{tpu_custom_call.1} parent=11 // pred_region
          _
        $region36: #{tpu_custom_call.1} parent=11 // pred_fallthru
          _
      $region12: #{tpu_custom_call.1} parent=5 // pred_fallthru
        _
      %p272 = scmp.lt.s32.totalorder %s17, 2
      // Predicated region
      $region37: #{tpu_custom_call.1} parent=5 // pred_check
        %p273 = pneg %p272
      $region38: #{tpu_custom_call.1} parent=5 // pred_check_branch
        %275 = sbr.rel (%p273) target = $region40
      $region39: #{tpu_custom_call.1} parent=5 // pred_region
        // Predicated region
        $region41: #{tpu_custom_call.1} parent=39 // pred_check
          %p276 = pneg %p51
        $region42: #{tpu_custom_call.1} parent=39 // pred_check_branch
          %278 = sbr.rel (%p276) target = $region44
        $region43: #{tpu_custom_call.1} parent=39 // pred_region
          %p279 = scmp.lt.s32.totalorder %s24, 1
          %s280 = scalar_select %p279, %s24, 1
          %p281 = scmp.lt.s32.totalorder %s25, 0
          %s282 = scalar_select %p281, %s25, 0
          %s283 = sadd.s32 %s282, %s280
          %s284 = smul.addr %s283, 4
          %s285 = scalar_lea.vmem %s0, %s284
        $region44: #{tpu_custom_call.1} parent=39 // pred_fallthru
          _
        // Predicated region
        $region45: #{tpu_custom_call.1} parent=39 // pred_check
          %p286 = pneg %p79
        $region46: #{tpu_custom_call.1} parent=39 // pred_check_branch
          %288 = sbr.rel (%p286) target = $region48
        $region47: #{tpu_custom_call.1} parent=39 // pred_region
          %p289 = scmp.lt.s32.totalorder %s24, 1
          %s290 = scalar_select %p289, %s24, 1
          %p291 = scmp.lt.s32.totalorder %s25, 0
          %s292 = scalar_select %p291, %s25, 0
          %s293 = sadd.s32 %s292, %s290
          %s294 = smul.addr %s293, 4
          %s295 = scalar_lea.vmem %s1, %s294
        $region48: #{tpu_custom_call.1} parent=39 // pred_fallthru
          _
      $region40: #{tpu_custom_call.1} parent=5 // pred_fallthru
        _
      %p296 = scmp.le.s32.totalorder 1, %s17
      %p297 = scmp.lt.s32.totalorder %s17, 3
      %p298 = pnand %p296, %p297
      %p299 = pneg %p298
      // Predicated region
      $region49: #{tpu_custom_call.1} parent=5 // pred_check
        _
      $region50: #{tpu_custom_call.1} parent=5 // pred_check_branch
        %301 = sbr.rel (%p298) target = $region52
      $region51: #{tpu_custom_call.1} parent=5 // pred_region
        %s302 = ssub.s32 %s17, 1
        %p303 = scmp.lt.s32.totalorder %s26, 1
        %s304 = scalar_select %p303, %s26, 1
        %p305 = scmp.lt.s32.totalorder %s27, 0
        %s306 = scalar_select %p305, %s27, 0
        %s307 = sadd.s32 %s306, %s304
        %s308 = smul.addr %s307, 4
        %s309 = scalar_lea.vmem %s0, %s308
        %p310 = pneg %p57
        %p311 = pneg %p54
        %p312 = scmp.lt.s32.totalorder %s26, 1
        %s313 = scalar_select %p312, %s26, 1
        %p314 = scmp.lt.s32.totalorder %s27, 0
        %s315 = scalar_select %p314, %s27, 0
        %s316 = sadd.s32 %s315, %s313
        %s317 = smul.addr %s316, 4
        %s318 = scalar_lea.vmem %s1, %s317
        %p319 = pneg %p85
        %p320 = pneg %p82
        %p321 = pneg %p106
        %p322 = pneg %p103
        %p323 = pneg %p127
        %p324 = pneg %p124
        %p325 = pneg %p148
        %p326 = pneg %p145
        %p327 = pneg %p169
        %p328 = pneg %p166
        %p329 = pneg %p190
        %p330 = pneg %p187
        %p331 = pneg %p211
        %p332 = pneg %p208
        %p333 = pneg %p239
        %p334 = pneg %p236
        %s335 = sand.u32 %s226, 1
        %s336 = scalar_lea.sflag [#allocation5], %s335
        %s337 = sand.u32 %s226, 1
        %s338 = smul.addr %s337, 8
        %s339 = scalar_lea.vmem [#allocation4], %s338
        %p340 = scmp.lt.s32.totalorder %s26, 1
        %s341 = scalar_select %p340, %s26, 1
        %p342 = scmp.lt.s32.totalorder %s27, 0
        %s343 = scalar_select %p342, %s27, 0
        %s344 = sadd.s32 %s343, %s341
        %s345 = smul.addr %s344, 4
        %s346 = scalar_lea.vmem %s0, %s345
        %p347 = scmp.lt.s32.totalorder %s26, 1
        %s348 = scalar_select %p347, %s26, 1
        %p349 = scmp.lt.s32.totalorder %s27, 0
        %s350 = scalar_select %p349, %s27, 0
        %s351 = sadd.s32 %s350, %s348
        %s352 = smul.addr %s351, 4
        %s353 = scalar_lea.vmem %s1, %s352
        %v355 = vld [vmem:[%s346] sm:$0xf]
        %v356 = vld [vmem:[%s2] sm:$0xf]
        %358 = vset.pattern.permute.xlu0 0
        %359 = vperm.xlu0 %358, %v356
        %v360 = vpop.permute.xlu0 %359
        %v362 = vmul.f32 %v355, %v360
        %v363 = vld [vmem:[%s3] sm:$0xf]
        %365 = vset.pattern.permute.xlu0 0
        %366 = vperm.xlu0 %365, %v363
        %v367 = vpop.permute.xlu0 %366
        %v369 = vadd.f32 %v362, %v367
        %v370 = vxor.u32 %v369, 2147483648
        %v371 = vmul.f32 %v370, 1.442695
        %v372 = vpow.pop %v371
        %v373 = vadd.f32 %v372, 1.0
        %v374 = vrcp.pop %v373
        %v375 = vmul.f32 1.0, %v374
        %v376 = vmul.f32 %v369, %v375
        %v377 = vpack.c.bf16 %v376, %v376
        %v378 = vld [vmem:[%s353] sm:$0xf]
        %v379 = vmul.f32 %v378, %v360
        %v380 = vadd.f32 %v379, %v367
        %v381 = vxor.u32 %v380, 2147483648
        %v382 = vmul.f32 %v381, 1.442695
        %v383 = vpow.pop %v382
        %v384 = vadd.f32 %v383, 1.0
        %v385 = vrcp.pop %v384
        %v386 = vmul.f32 1.0, %v385
        %v387 = vmul.f32 %v380, %v386
        %v388 = vlaneseq
        %v389 = vand.u32 %v388, 127
        %vm390 = vcmp.lt.s32.totalorder %v389, 2
        %p391 = scmp.gt.s32.totalorder %s27, 0
        %s392 = scalar_select %p391, 1, 0
        %v393 = vstv %s392
        %vm394 = vcmp.eq.s32.totalorder %v393, 1
        %vm395 = vmand %vm390, %vm394
        %vm396 = vcmp.ge.s32.totalorder %v389, 2
        %p397 = scmp.lt.s32.totalorder %s27, 0
        %s398 = scalar_select %p397, 1, 0
        %v399 = vstv %s398
        %vm400 = vcmp.eq.s32.totalorder %v399, 1
        %vm401 = vmand %vm396, %vm400
        %vm402 = vmor %vm395, %vm401
        %v403 = vsel %vm402, %v387, 0.0
        %v404 = vpack.c.bf16 %v403, %v403
        %vm405 = vcmask 9216
        %406 = vst.msk [vmem:[#allocation2] sm:$0x3] %vm405, %v404
        %v408 = vunpack.c.l.b16 %v377
        %v409 = vpack.c.b16 %v408, %v408
        %410 = vrot.lane.b32.xlu0 %v409, 2
        %v411 = vpop.permute.xlu0 %410
        %vm413 = vcmask 140304
        %414 = vst.msk [vmem:[#allocation2] sm:$0x3] %vm413, %v411
        %v416 = vunpack.c.l.b16 %v404
        %v417 = vpack.c.b16 %v416, %v416
        %v418 = vrot.slane %v417, 6
        %419 = vrot.lane.b32.xlu0 %v418, 127
        %v420 = vpop.permute.xlu0 %419
        %vm422 = vcmask 3074
        %423 = vst.msk [vmem:[#allocation2] sm:$0xc] %vm422, %v420
        %v424 = vrot.slane %v409, 6
        %425 = vrot.lane.b32.xlu0 %v424, 1
        %v426 = vpop.permute.xlu0 %425
        %vm428 = vcmask 134154
        %429 = vst.msk [vmem:[#allocation2] sm:$0xc] %vm428, %v426
        %430 = vrot.lane.b32.xlu0 %v418, 15
        %v431 = vpop.permute.xlu0 %430
        %vm433 = vcmask 142474
        %434 = vst.msk [vmem:[#allocation2] sm:$0xc] %vm433, %v431
        %vm435 = vcmask 123904
        %436 = vst.msk [vmem:[#allocation2 + $0x4] sm:$0x3] %vm435, %v377
        %437 = vrot.lane.b32.xlu0 %v417, 14
        %v438 = vpop.permute.xlu0 %437
        %vm440 = vcmask 140416
        %441 = vst.msk [vmem:[#allocation2 + $0x4] sm:$0x3] %vm440, %v438
        %v442 = vld [vmem:[%s4] sm:$0xf]
        %v443 = vld [vmem:[#allocation2] sm:$0xf]
        %v444 = vld [vmem:[#allocation2 + $0x4] sm:$0x3]
        %v445 = vld [vmem:[%s5] sm:$0xff]
        %447 = vset.pattern.permute.xlu0 0
        %448 = vperm.xlu0 %447, %v445
        %v449 = vpop.permute.xlu0 %448
        %v453 = vunpack.c.l.b16 %v443
        %v454 = vunpack.c.l.b16 %v444
        %v455 = vpack.c.b16 %v454, %v453
        %vm456 = vcmask 97280
        %v458 = vsel %vm456, %v442, 0
        %vm460 = vcmask 1045504
        %v462 = vsel %vm460, %v455, 0
        %464 = vmatprep.subr.bf16.mxu0 0
        %465 = vmatpush1.bf16.msra.mxu0 %v462
        %466 = vmatprep.subr.bf16.mxu0 0
        %467 = vmatpush1.bf16.msra.mxu0 0
        %468 = vmatprep.subr.bf16.mxu0 0
        %469 = vmatpush1.bf16.msra.mxu0 0
        %470 = vmatprep.subr.bf16.mxu0 0
        %471 = vmatpush1.bf16.msra.mxu0 0
        %472 = vmatprep.subr.bf16.mxu0 0
        %473 = vmatpush1.bf16.msra.mxu0 0
        %474 = vmatprep.subr.bf16.mxu0 0
        %475 = vmatpush1.bf16.msra.mxu0 0
        %476 = vmatprep.subr.bf16.mxu0 0
        %477 = vmatpush1.bf16.msra.mxu0 0
        %478 = vmatprep.subr.bf16.mxu0 0
        %479 = vmatpush1.bf16.msra.mxu0 0
        %480 = vmatprep.subr.bf16.mxu0 0
        %481 = vmatpush1.bf16.msra.mxu0 0
        %482 = vmatprep.subr.bf16.mxu0 0
        %483 = vmatpush1.bf16.msra.mxu0 0
        %484 = vmatprep.subr.bf16.mxu0 0
        %485 = vmatpush1.bf16.msra.mxu0 0
        %486 = vmatprep.subr.bf16.mxu0 0
        %487 = vmatpush1.bf16.msra.mxu0 0
        %488 = vmatprep.subr.bf16.mxu0 0
        %489 = vmatpush1.bf16.msra.mxu0 0
        %490 = vmatprep.subr.bf16.mxu0 0
        %491 = vmatpush1.bf16.msra.mxu0 0
        %492 = vmatprep.subr.bf16.mxu0 0
        %493 = vmatpush1.bf16.msra.mxu0 0
        %494 = vmatprep.subr.bf16.mxu0 0
        %495 = vmatpush1.bf16.msra.mxu0 0
        %496 = vmatprep.mubr.bf16.mxu0 0
        %497 = vmatmul.mubr.bf16.gmra.mrb[0].mxu0 %v458
        %v498 = vpop.f32.mrb[0].mxu0
        %v499 = vadd.f32 %v449, %v498
        %v500 = vpop.f32.mrb[0].mxu0
        %v501 = vpop.f32.mrb[0].mxu0
        %v502 = vpop.f32.mrb[0].mxu0
        %503 = vdwg.mxu0
        %v504 = vxor.u32 %v499, 2147483648
        %v505 = vmul.f32 %v504, 1.442695
        %v506 = vpow.pop %v505
        %v507 = vadd.f32 %v506, 1.0
        %v508 = vrcp.pop %v507
        %v509 = vmul.f32 1.0, %v508
        %v510 = vmul.f32 %v499, %v509
        %v511 = vpack.c.bf16 %v510, %v510
        %vm512 = vcmask 125952
        %513 = vst.msk [vmem:[#allocation3] sm:$0xf] %vm512, %v511
        %v515 = vunpack.c.l.b16 %v511
        %v516 = vpack.c.b16 %v515, %v515
        %517 = vrot.lane.b32.xlu0 %v516, 127
        %v518 = vpop.permute.xlu0 %517
        %520 = vst.msk [vmem:[#allocation3 + $0x4] sm:$0xf] %vm512, %v518
        %521 = vrot.lane.b32.xlu0 %v516, 126
        %v522 = vpop.permute.xlu0 %521
        %524 = vst.msk [vmem:[#allocation3 + $0x8] sm:$0xf] %vm512, %v522
        %v525 = vpack.c.bf16 %v355, %v355
        %526 = vst.msk [vmem:[#allocation3 + $0xc] sm:$0x3] %vm435, %v525
        %p527 = scmp.eq.s32.totalorder %s27, 0
        // Predicated region
        $region53: #{tpu_custom_call.1} parent=51 // pred_check
          %p528 = pneg %p527
        $region54: #{tpu_custom_call.1} parent=51 // pred_check_branch
          %530 = sbr.rel (%p528) target = $region56
        $region55: #{tpu_custom_call.1} parent=51 // pred_region
          %vm531 = vcmask 3072
          %532 = vst.msk [vmem:[#allocation3] sm:$0xf] %vm531, 0
          %vm533 = vcmask 126072
          %534 = vst.msk [vmem:[#allocation3 + $0x8] sm:$0xf] %vm533, 0
        $region56: #{tpu_custom_call.1} parent=51 // pred_fallthru
          _
        %v535 = vld [vmem:[%s6] sm:$0xf]
        %v536 = vld [vmem:[#allocation3] sm:$0xf]
        %v537 = vld [vmem:[#allocation3 + $0x4] sm:$0xf]
        %v538 = vld [vmem:[#allocation3 + $0x8] sm:$0xf]
        %v539 = vld [vmem:[#allocation3 + $0xc] sm:$0x3]
        %v540 = vld [vmem:[%s7] sm:$0xff]
        %542 = vset.pattern.permute.xlu0 0
        %543 = vperm.xlu0 %542, %v540
        %v544 = vpop.permute.xlu0 %543
        %v550 = vunpack.c.l.b16 %v536
        %v551 = vunpack.c.l.b16 %v537
        %v552 = vunpack.c.l.b16 %v538
        %v553 = vunpack.c.l.b16 %v539
        %v554 = vpack.c.b16 %v551, %v550
        %v555 = vpack.c.b16 %v553, %v552
        %vm557 = vcmask 228352
        %v559 = vsel %vm557, %v535, 0
        %v562 = vsel %vm460, %v555, 0
        %564 = vmatprep.subr.bf16.mxu0 0
        %565 = vmatpush1.bf16.msra.mxu0 %v554
        %566 = vmatprep.subr.bf16.mxu0 0
        %567 = vmatpush1.bf16.msra.mxu0 %v562
        %568 = vmatprep.subr.bf16.mxu0 0
        %569 = vmatpush1.bf16.msra.mxu0 0
        %570 = vmatprep.subr.bf16.mxu0 0
        %571 = vmatpush1.bf16.msra.mxu0 0
        %572 = vmatprep.subr.bf16.mxu0 0
        %573 = vmatpush1.bf16.msra.mxu0 0
        %574 = vmatprep.subr.bf16.mxu0 0
        %575 = vmatpush1.bf16.msra.mxu0 0
        %576 = vmatprep.subr.bf16.mxu0 0
        %577 = vmatpush1.bf16.msra.mxu0 0
        %578 = vmatprep.subr.bf16.mxu0 0
        %579 = vmatpush1.bf16.msra.mxu0 0
        %580 = vmatprep.subr.bf16.mxu0 0
        %581 = vmatpush1.bf16.msra.mxu0 0
        %582 = vmatprep.subr.bf16.mxu0 0
        %583 = vmatpush1.bf16.msra.mxu0 0
        %584 = vmatprep.subr.bf16.mxu0 0
        %585 = vmatpush1.bf16.msra.mxu0 0
        %586 = vmatprep.subr.bf16.mxu0 0
        %587 = vmatpush1.bf16.msra.mxu0 0
        %588 = vmatprep.subr.bf16.mxu0 0
        %589 = vmatpush1.bf16.msra.mxu0 0
        %590 = vmatprep.subr.bf16.mxu0 0
        %591 = vmatpush1.bf16.msra.mxu0 0
        %592 = vmatprep.subr.bf16.mxu0 0
        %593 = vmatpush1.bf16.msra.mxu0 0
        %594 = vmatprep.subr.bf16.mxu0 0
        %595 = vmatpush1.bf16.msra.mxu0 0
        %596 = vmatprep.mubr.bf16.mxu0 0
        %597 = vmatmul.mubr.bf16.gmra.mrb[0].mxu0 %v559
        %v598 = vpop.f32.mrb[0].mxu0
        %v599 = vadd.f32 %v544, %v598
        %v600 = vpop.f32.mrb[0].mxu0
        %v601 = vpop.f32.mrb[0].mxu0
        %v602 = vpop.f32.mrb[0].mxu0
        %603 = vdwg.mxu0
        %vm604 = vcmask 130048
        %605 = vst.msk [vmem:[%s339] sm:$0xff] %vm604, %v599
        %s606 = sand.u32 %s226, 1
        %s607 = scalar_lea.sflag [#allocation5], %s606
        %s608 = sand.u32 %s226, 1
        %s609 = smul.addr %s608, 8
        %s610 = scalar_lea.vmem [#allocation4], %s609
        // Predicated region
        $region57: #{tpu_custom_call.1} parent=51 // pred_check
          %p611 = pneg %p236
        $region58: #{tpu_custom_call.1} parent=51 // pred_check_branch
          %613 = sbr.rel (%p611) target = $region60
        $region59: #{tpu_custom_call.1} parent=51 // pred_region
          %s615 = ssub.s32 128, 128
          %616 = vsyncadd %s607, %s615
          %s617 = sadd.s32 %s27, %s26
          %s618 = smul.addr %s617, 128
          %s619 = scalar_lea.hbm %s8, %s618
          %s621 = sshll.u32 %s610, 4
          %s622 = int_to_ptr.vmem [resolvable:$true] %s621
          %624 = dma.vmem_to_hbm [thread:$0]  %s622, 128, %s619, %s607
        $region60: #{tpu_custom_call.1} parent=51 // pred_fallthru
          _
      $region52: #{tpu_custom_call.1} parent=5 // pred_fallthru
        _
      %p625 = scmp.le.s32.totalorder 2, %s17
      // Predicated region
      $region61: #{tpu_custom_call.1} parent=5 // pred_check
        %p626 = pneg %p625
      $region62: #{tpu_custom_call.1} parent=5 // pred_check_branch
        %628 = sbr.rel (%p626) target = $region64
      $region63: #{tpu_custom_call.1} parent=5 // pred_region
        %s629 = ssub.s32 %s17, 2
        // Predicated region
        $region65: #{tpu_custom_call.1} parent=63 // pred_check
          %p630 = pneg %p242
        $region66: #{tpu_custom_call.1} parent=63 // pred_check_branch
          %632 = sbr.rel (%p630) target = $region68
        $region67: #{tpu_custom_call.1} parent=63 // pred_region
          %s633 = sand.u32 %s227, 1
          %s634 = scalar_lea.sflag [#allocation5], %s633
          %s635 = sand.u32 %s227, 1
          %s636 = smul.addr %s635, 8
          %s637 = scalar_lea.vmem [#allocation4], %s636
          %638 = dma.done %s634, 128
        $region68: #{tpu_custom_call.1} parent=63 // pred_fallthru
          _
      $region64: #{tpu_custom_call.1} parent=5 // pred_fallthru
        _
    $region6: #{tpu_custom_call.1} parent=1 // loop_footer
      %s21 = sadd.s32 1, %s17
    $region7: #{tpu_custom_call.1} parent=1 // loop_footer_branch
      %16 = sbr.rel target = $region3
    $region8: #{tpu_custom_call.1} parent=1 // loop_exit
      _
    %639 = vsyncpa [#allocation5], 1
    %s640 = scalar_lea.sflag [#allocation5], 1
    %641 = vsyncpa %s640, 1

</llo_original>
